<compile_context>
chip_gen: v6e
topology: v6e:2x2x1
jax: 0.10.0
libtpu: 0.0.40
codegen_flags: <defaults>
</compile_context>

<pallas_src>
import functools
import math

import jax
import jax.numpy as jnp
import numpy as np
from jax import lax
from jax.experimental import pallas as pl
from jax.experimental.pallas import tpu as pltpu

# Explicit scoped-VMEM cap: 3x the v5e default (16 MiB) and safely below v7x's 64 MiB
# physical VMEM.  All block sizes below are chosen to stay well inside this.
_VMEM_LIMIT = 48 * 1024 * 1024


# ---------------------------------------------------------------------------
# Tile-size helpers
# ---------------------------------------------------------------------------
def _pick_tile(dim, preferred, align):
    """Largest divisor of `dim` that is a multiple of `align` and <= `preferred`.

    Falls back to `dim` only when `dim` itself is already <= preferred (small dims)
    or when no aligned divisor exists (rare, e.g. prime dims)."""
    if dim <= preferred:
        return dim
    t = (preferred // align) * align
    while t >= align:
        if dim % t == 0:
            return t
        t -= align
    return dim


def _linear_tiles(M, K, N, itemsize):
    """Tiles for a full-K (weight-resident) matmul: x block (tm, K), w block (K, tn)."""
    w_budget = 8 * 1024 * 1024   # (K, tn) weight strip kept resident across the M sweep
    x_budget = 4 * 1024 * 1024   # per-step activation block
    tn = N if K * N * itemsize <= w_budget else _pick_tile(N, 512, 128)
    cap = x_budget // max(1, K * itemsize)
    cap = max(8, min(512, (cap // 8) * 8))
    tm = _pick_tile(M, cap, 8)
    # NOTE: for extremely large embed_dim a K-tiled accumulating variant would be needed;
    # embed_dim-sized K always fits the budgets above for realistic transformer widths.
    return tm, tn


# ---------------------------------------------------------------------------
# Pallas kernels
# ---------------------------------------------------------------------------
def linear_kernel(x_ref, w_ref, o_ref):
    """o = x @ w, full-K single dot (no accumulator / pl.when phases needed)."""
    o_ref[...] = jnp.dot(x_ref[...], w_ref[...],
                         preferred_element_type=jnp.float32).astype(o_ref.dtype)


def qkv_proj_kernel(xq_ref, xk_ref, xv_ref, wq_ref, wk_ref, wv_ref,
                    qo_ref, ko_ref, vo_ref):
    """Fused Q/K/V projections (3 streams, one launch), full-K, weight-resident."""
    qo_ref[...] = jnp.dot(xq_ref[...], wq_ref[...],
                          preferred_element_type=jnp.float32).astype(qo_ref.dtype)
    ko_ref[...] = jnp.dot(xk_ref[...], wk_ref[...],
                          preferred_element_type=jnp.float32).astype(ko_ref.dtype)
    vo_ref[...] = jnp.dot(xv_ref[...], wv_ref[...],
                          preferred_element_type=jnp.float32).astype(vo_ref.dtype)


def attn_kernel(q_ref, k_ref, v_ref, mask_ref, ctx_ref, prob_ref, *, approx_recip):
    """Scaled dot-product attention for one (batch, head, q-block) grid step.

    q_ref   : (1, 1, tq, d_k)   -- 1/sqrt(d_k) already folded into Wq
    k_ref   : (1, 1, S,  d_k)   -- resident across the q-block sweep (index map constant)
    v_ref   : (1, 1, S,  d_k)
    mask_ref: (1, tq, S) int8   -- nonzero = masked
    ctx_ref : (1, 1, tq, d_k)
    prob_ref: (1, 1, tq, S)
    """
    q = q_ref[0, 0]                      # (tq, d_k)
    k = k_ref[0, 0]                      # (S, d_k)
    v = v_ref[0, 0]                      # (S, d_k)
    masked = mask_ref[0] != 0            # (tq, S)

    # QK^T without materializing a transpose: contract dim 1 of both operands.
    s = lax.dot_general(q, k, (((1,), (1,)), ((), ())),
                        preferred_element_type=jnp.float32)       # (tq, S)
    s = jnp.where(masked, jnp.float32(-1000000000.0), s)

    m = jnp.max(s, axis=-1, keepdims=True)
    e = jnp.exp(s - m)
    p = e * pl.reciprocal(jnp.sum(e, axis=-1, keepdims=True), approx=approx_recip)

    prob_ref[0, 0] = p.astype(prob_ref.dtype)
    ctx_ref[0, 0] = jnp.dot(p.astype(v.dtype), v,
                            preferred_element_type=jnp.float32).astype(ctx_ref.dtype)


# ---------------------------------------------------------------------------
# Wrappers
# ---------------------------------------------------------------------------
def pallas_linear(x, w_t, out_dtype=None):
    """x: (M, K), w_t: (K, N) -> (M, N). Full-K, weight strip resident across M sweep."""
    M, K = x.shape
    _, N = w_t.shape
    out_dtype = out_dtype or x.dtype
    tm, tn = _linear_tiles(M, K, N, x.dtype.itemsize)
    return pl.pallas_call(
        linear_kernel,
        out_shape=jax.ShapeDtypeStruct((M, N), out_dtype),
        grid=(N // tn, M // tm),   # N outer: weight block index constant across M sweep
        in_specs=[pl.BlockSpec((tm, K), lambda j, i: (i, 0)),
                  pl.BlockSpec((K, tn), lambda j, i: (0, j))],
        out_specs=pl.BlockSpec((tm, tn), lambda j, i: (i, j)),
        compiler_params=pltpu.CompilerParams(
            dimension_semantics=("parallel", "parallel"),
            vmem_limit_bytes=_VMEM_LIMIT),
    )(x, w_t)


def pallas_qkv_proj(xq, xk, xv, wq_t, wk_t, wv_t):
    """Fused projections (xq@wq_t, xk@wk_t, xv@wv_t) from a single launch."""
    M, K = xq.shape
    N = wq_t.shape[1]
    tm, tn = _linear_tiles(M, K, N, xq.dtype.itemsize)
    x_spec = pl.BlockSpec((tm, K), lambda j, i: (i, 0))
    w_spec = pl.BlockSpec((K, tn), lambda j, i: (0, j))
    o_spec = pl.BlockSpec((tm, tn), lambda j, i: (i, j))
    out_sd = jax.ShapeDtypeStruct((M, N), xq.dtype)
    return pl.pallas_call(
        qkv_proj_kernel,
        out_shape=(out_sd, out_sd, out_sd),
        grid=(N // tn, M // tm),
        in_specs=[x_spec, x_spec, x_spec, w_spec, w_spec, w_spec],
        out_specs=(o_spec, o_spec, o_spec),
        compiler_params=pltpu.CompilerParams(
            dimension_semantics=("parallel", "parallel"),
            vmem_limit_bytes=_VMEM_LIMIT),
    )(xq, xk, xv, wq_t, wk_t, wv_t)


def pallas_attention(q, k, v, mask_i8, *, prob_dtype=jnp.float32, approx_recip=False):
    """q, k, v: (B, H, S, d_k); mask_i8: (B, S, S) int8 (nonzero = masked)."""
    B, H, S, d_k = q.shape
    tq = _pick_tile(S, 256, 8)
    kernel = functools.partial(attn_kernel, approx_recip=approx_recip)
    # K/V index maps ignore the q-block axis, so each (b, h) head's K/V tile is DMA'd
    # once and stays resident across the whole q sweep.
    ctx, prob = pl.pallas_call(
        kernel,
        out_shape=(jax.ShapeDtypeStruct((B, H, S, d_k), q.dtype),
                   jax.ShapeDtypeStruct((B, H, S, S), prob_dtype)),
        grid=(B, H, S // tq),
        in_specs=[pl.BlockSpec((1, 1, tq, d_k), lambda b, h, qi: (b, h, qi, 0)),
                  pl.BlockSpec((1, 1, S, d_k), lambda b, h, qi: (b, h, 0, 0)),
                  pl.BlockSpec((1, 1, S, d_k), lambda b, h, qi: (b, h, 0, 0)),
                  pl.BlockSpec((1, tq, S), lambda b, h, qi: (b, qi, 0))],
        out_specs=(pl.BlockSpec((1, 1, tq, d_k), lambda b, h, qi: (b, h, qi, 0)),
                   pl.BlockSpec((1, 1, tq, S), lambda b, h, qi: (b, h, qi, 0))),
        compiler_params=pltpu.CompilerParams(
            dimension_semantics=("parallel", "parallel", "parallel"),
            vmem_limit_bytes=_VMEM_LIMIT),
    )(q, k, v, mask_i8)
    return ctx, prob


def prepare_params(params, n_head, dtype=jnp.float32):
    """One-time weight prep: transpose (out,in)->(in,out), fold 1/sqrt(d_k) into Wq,
    cast to the compute dtype, and build the concatenated QKV weight for self-attention."""
    E = params["Wq"].shape[0]
    d_k = E // n_head
    scale = 1.0 / math.sqrt(d_k)
    wq_t = (params["Wq"].T * scale).astype(dtype)
    wk_t = params["Wk"].T.astype(dtype)
    wv_t = params["Wv"].T.astype(dtype)
    return {
        "Wq_t": wq_t, "Wk_t": wk_t, "Wv_t": wv_t,
        "Wqkv_t": jnp.concatenate([wq_t, wk_t, wv_t], axis=1),   # (E, 3E)
        "Wo_t": params["Wo"].T.astype(dtype),
    }


def multi_head_attention(Q, K, V, mask, prepared, n_head, *,
                         compute_dtype=jnp.float32, prob_dtype=jnp.float32,
                         approx_recip=None):
    """Forward pass matching MultiHeadAttention.forward (eval mode)."""
    B, S, E = Q.shape
    d_k = E // n_head
    if approx_recip is None:
        approx_recip = compute_dtype != jnp.float32   # EUP approx reciprocal in perf mode

    xq = Q.reshape(B * S, E).astype(compute_dtype)
    if Q is K and K is V:
        # Self-attention fast path: one matmul on the concatenated (E, 3E) weight reads
        # the activations once instead of three times.
        qkv = pallas_linear(xq, prepared["Wqkv_t"]).reshape(B * S, 3, E)
        q2d, k2d, v2d = qkv[:, 0, :], qkv[:, 1, :], qkv[:, 2, :]
    else:
        xk = K.reshape(B * S, E).astype(compute_dtype)
        xv = V.reshape(B * S, E).astype(compute_dtype)
        q2d, k2d, v2d = pallas_qkv_proj(
            xq, xk, xv, prepared["Wq_t"], prepared["Wk_t"], prepared["Wv_t"])

    # Head split (the same layout change the PyTorch module does with .view/.transpose).
    # O(B*S*E) bytes -- negligible next to the O(B*H*S^2) attention traffic -- and it keeps
    # every Pallas block's last dim equal to a full array dim (lane-layout legal for any d_k).
    def to_heads(x2d):
        return x2d.reshape(B, S, n_head, d_k).transpose(0, 2, 1, 3)   # (B, H, S, d_k)

    if mask is None:
        mask_i8 = jnp.zeros((B, S, S), dtype=jnp.int8)
    else:
        mask_i8 = mask.astype(jnp.int8)   # nonzero = masked; 4x fewer DMA bytes than f32

    ctx, attn_prob = pallas_attention(to_heads(q2d), to_heads(k2d), to_heads(v2d),
                                      mask_i8, prob_dtype=prob_dtype,
                                      approx_recip=approx_recip)

    # Merge heads -> (B*S, E) concat layout, then final Linear(bias=False).
    ctx2d = ctx.transpose(0, 2, 1, 3).reshape(B * S, E)
    out = pallas_linear(ctx2d, prepared["Wo_t"]).reshape(B, S, E)
    # dropout_multi at eval = identity
    return out, attn_prob


# ---------------------------------------------------------------------------
# Pure-JAX reference for verification
# ---------------------------------------------------------------------------
def reference_mha(Q, K, V, mask, params, n_head):
    B, S, E = Q.shape
    d_k = E // n_head
    q = (Q @ params["Wq"].T).reshape(B, S, n_head, d_k).transpose(0, 2, 1, 3)
    k = (K @ params["Wk"].T).reshape(B, S, n_head, d_k).transpose(0, 2, 1, 3)
    v = (V @ params["Wv"].T).reshape(B, S, n_head, d_k).transpose(0, 2, 1, 3)
    score = jnp.einsum("bhqd,bhkd->bhqk", q, k) / math.sqrt(d_k)
    attn = jnp.where(mask[:, None, :, :], -1000000000.0, score)
    p = jax.nn.softmax(attn, axis=-1)
    ctx = jnp.einsum("bhqk,bhkd->bhqd", p, v)
    ctx = ctx.transpose(0, 2, 1, 3).reshape(B, S, E)
    return ctx @ params["Wo"].T, p


# ---------------------------------------------------------------------------
if __name__ == "__main__":
    B, S, E, H = 2, 8, 32, 4  # batch, seq, embed_dim, n_head

    key = jax.random.PRNGKey(0)
    kq, kk, kv, kwq, kwk, kwv, kwo, kmask = jax.random.split(key, 8)

    Q = jax.random.normal(kq, (B, S, E), dtype=jnp.float32)
    K = jax.random.normal(kk, (B, S, E), dtype=jnp.float32)
    V = jax.random.normal(kv, (B, S, E), dtype=jnp.float32)

    # nn.Linear weight shape: (out, in), no bias
    params = {
        "Wq": 0.1 * jax.random.normal(kwq, (E, E), dtype=jnp.float32),
        "Wk": 0.1 * jax.random.normal(kwk, (E, E), dtype=jnp.float32),
        "Wv": 0.1 * jax.random.normal(kwv, (E, E), dtype=jnp.float32),
        "Wo": 0.1 * jax.random.normal(kwo, (E, E), dtype=jnp.float32),
    }
    # Boolean mask (B, S, S): True = position is masked out
    mask = jax.random.bernoulli(kmask, 0.2, (B, S, S))

    ref_out, ref_prob = reference_mha(Q, K, V, mask, params, H)

    # 1) exact-parity run: f32 compute, exact reciprocal
    prep_f32 = prepare_params(params, H, dtype=jnp.float32)
    out, prob = multi_head_attention(Q, K, V, mask, prep_f32, H,
                                     compute_dtype=jnp.float32)
    out, prob = jax.block_until_ready((out, prob))
    np.testing.assert_allclose(np.asarray(out), np.asarray(ref_out), atol=2e-4, rtol=2e-4)
    np.testing.assert_allclose(np.asarray(prob), np.asarray(ref_prob), atol=3e-5, rtol=2e-4)

    # 2) production-mode run: bf16 MXU operands (f32 accumulation), bf16 prob writeback,
    #    EUP approximate reciprocal in the softmax (looser tolerances by construction).
    prep_bf16 = prepare_params(params, H, dtype=jnp.bfloat16)
    out_bf, prob_bf = multi_head_attention(Q, K, V, mask, prep_bf16, H,
                                           compute_dtype=jnp.bfloat16,
                                           prob_dtype=jnp.bfloat16)
    out_bf, prob_bf = jax.block_until_ready((out_bf, prob_bf))
    np.testing.assert_allclose(np.asarray(out_bf.astype(jnp.float32)),
                               np.asarray(ref_out), atol=5e-2, rtol=5e-2)
    np.testing.assert_allclose(np.asarray(prob_bf.astype(jnp.float32)),
                               np.asarray(ref_prob), atol=2e-2, rtol=2e-2)

    # 3) self-attention fast path (single matmul on the concatenated QKV weight)
    ref_out_s, ref_prob_s = reference_mha(Q, Q, Q, mask, params, H)
    out_s, prob_s = multi_head_attention(Q, Q, Q, mask, prep_f32, H,
                                         compute_dtype=jnp.float32)
    out_s, prob_s = jax.block_until_ready((out_s, prob_s))
    np.testing.assert_allclose(np.asarray(out_s), np.asarray(ref_out_s), atol=2e-4, rtol=2e-4)
    np.testing.assert_allclose(np.asarray(prob_s), np.asarray(ref_prob_s), atol=3e-5, rtol=2e-4)

    print("KERNEL_OK")
</pallas_src>

<mosaic_0001>
module attributes {stable_mosaic.version = 11 : i64} {
  func.func @qkv_proj_kernel(%arg0: i32, %arg1: i32, %arg2: memref<16x32xf32, #tpu.memory_space<vmem>>, %arg3: memref<16x32xf32, #tpu.memory_space<vmem>>, %arg4: memref<16x32xf32, #tpu.memory_space<vmem>>, %arg5: memref<32x32xf32, #tpu.memory_space<vmem>>, %arg6: memref<32x32xf32, #tpu.memory_space<vmem>>, %arg7: memref<32x32xf32, #tpu.memory_space<vmem>>, %arg8: memref<16x32xf32, #tpu.memory_space<vmem>>, %arg9: memref<16x32xf32, #tpu.memory_space<vmem>>, %arg10: memref<16x32xf32, #tpu.memory_space<vmem>>) attributes {dimension_semantics = [#tpu.dimension_semantics<parallel>, #tpu.dimension_semantics<parallel>], iteration_bounds = array<i64: 1, 1>, scalar_prefetch = 0 : i64, scratch_operands = 0 : i64, tpu.core_type = #tpu.core_type<tc>, window_params = [{transform_indices = @transform_0, window_bounds = array<i64: 16, 32>}, {transform_indices = @transform_1, window_bounds = array<i64: 16, 32>}, {transform_indices = @transform_2, window_bounds = array<i64: 16, 32>}, {transform_indices = @transform_3, window_bounds = array<i64: 32, 32>}, {transform_indices = @transform_4, window_bounds = array<i64: 32, 32>}, {transform_indices = @transform_5, window_bounds = array<i64: 32, 32>}, {transform_indices = @transform_6, window_bounds = array<i64: 16, 32>}, {transform_indices = @transform_7, window_bounds = array<i64: 16, 32>}, {transform_indices = @transform_8, window_bounds = array<i64: 16, 32>}]} {
    %c0 = arith.constant 0 : index
    %c0_0 = arith.constant 0 : index
    %0 = vector.load %arg2[%c0, %c0_0] : memref<16x32xf32, #tpu.memory_space<vmem>>, vector<16x32xf32>
    %c0_1 = arith.constant 0 : index
    %c0_2 = arith.constant 0 : index
    %1 = vector.load %arg5[%c0_1, %c0_2] : memref<32x32xf32, #tpu.memory_space<vmem>>, vector<32x32xf32>
    %cst = arith.constant dense<0.000000e+00> : vector<16x32xf32>
    %2 = tpu.matmul %0, %1, %cst {dimension_numbers = #tpu.dot_dimension_numbers<[1], [0], [0], [1], [0, 0, 1, 1], [], []>} : vector<16x32xf32>, vector<32x32xf32>, vector<16x32xf32> -> vector<16x32xf32>
    %c0_3 = arith.constant 0 : index
    %c0_4 = arith.constant 0 : index
    %3 = vector.load %arg8[%c0_3, %c0_4] : memref<16x32xf32, #tpu.memory_space<vmem>>, vector<16x32xf32>
    tpu.vector_store %arg8[%c0_3, %c0_4], %2 {strides = array<i32>} : memref<16x32xf32, #tpu.memory_space<vmem>>, vector<16x32xf32>,
    %c0_5 = arith.constant 0 : index
    %c0_6 = arith.constant 0 : index
    %4 = vector.load %arg3[%c0_5, %c0_6] : memref<16x32xf32, #tpu.memory_space<vmem>>, vector<16x32xf32>
    %c0_7 = arith.constant 0 : index
    %c0_8 = arith.constant 0 : index
    %5 = vector.load %arg6[%c0_7, %c0_8] : memref<32x32xf32, #tpu.memory_space<vmem>>, vector<32x32xf32>
    %cst_9 = arith.constant dense<0.000000e+00> : vector<16x32xf32>
    %6 = tpu.matmul %4, %5, %cst_9 {dimension_numbers = #tpu.dot_dimension_numbers<[1], [0], [0], [1], [0, 0, 1, 1], [], []>} : vector<16x32xf32>, vector<32x32xf32>, vector<16x32xf32> -> vector<16x32xf32>
    %c0_10 = arith.constant 0 : index
    %c0_11 = arith.constant 0 : index
    %7 = vector.load %arg9[%c0_10, %c0_11] : memref<16x32xf32, #tpu.memory_space<vmem>>, vector<16x32xf32>
    tpu.vector_store %arg9[%c0_10, %c0_11], %6 {strides = array<i32>} : memref<16x32xf32, #tpu.memory_space<vmem>>, vector<16x32xf32>,
    %c0_12 = arith.constant 0 : index
    %c0_13 = arith.constant 0 : index
    %8 = vector.load %arg4[%c0_12, %c0_13] : memref<16x32xf32, #tpu.memory_space<vmem>>, vector<16x32xf32>
    %c0_14 = arith.constant 0 : index
    %c0_15 = arith.constant 0 : index
    %9 = vector.load %arg7[%c0_14, %c0_15] : memref<32x32xf32, #tpu.memory_space<vmem>>, vector<32x32xf32>
    %cst_16 = arith.constant dense<0.000000e+00> : vector<16x32xf32>
    %10 = tpu.matmul %8, %9, %cst_16 {dimension_numbers = #tpu.dot_dimension_numbers<[1], [0], [0], [1], [0, 0, 1, 1], [], []>} : vector<16x32xf32>, vector<32x32xf32>, vector<16x32xf32> -> vector<16x32xf32>
    %c0_17 = arith.constant 0 : index
    %c0_18 = arith.constant 0 : index
    %11 = vector.load %arg10[%c0_17, %c0_18] : memref<16x32xf32, #tpu.memory_space<vmem>>, vector<16x32xf32>
    tpu.vector_store %arg10[%c0_17, %c0_18], %10 {strides = array<i32>} : memref<16x32xf32, #tpu.memory_space<vmem>>, vector<16x32xf32>,
    return
  }
  func.func @transform_0(%arg0: i32, %arg1: i32) -> (i32, i32) {
    %c0_i32 = arith.constant 0 : i32
    %c0_i32_0 = arith.constant 0 : i32
    return %arg1, %c0_i32 : i32, i32
  }
  func.func @transform_1(%arg0: i32, %arg1: i32) -> (i32, i32) {
    %c0_i32 = arith.constant 0 : i32
    %c0_i32_0 = arith.constant 0 : i32
    return %arg1, %c0_i32 : i32, i32
  }
  func.func @transform_2(%arg0: i32, %arg1: i32) -> (i32, i32) {
    %c0_i32 = arith.constant 0 : i32
    %c0_i32_0 = arith.constant 0 : i32
    return %arg1, %c0_i32 : i32, i32
  }
  func.func @transform_3(%arg0: i32, %arg1: i32) -> (i32, i32) {
    %c0_i32 = arith.constant 0 : i32
    %c0_i32_0 = arith.constant 0 : i32
    return %c0_i32, %arg0 : i32, i32
  }
  func.func @transform_4(%arg0: i32, %arg1: i32) -> (i32, i32) {
    %c0_i32 = arith.constant 0 : i32
    %c0_i32_0 = arith.constant 0 : i32
    return %c0_i32, %arg0 : i32, i32
  }
  func.func @transform_5(%arg0: i32, %arg1: i32) -> (i32, i32) {
    %c0_i32 = arith.constant 0 : i32
    %c0_i32_0 = arith.constant 0 : i32
    return %c0_i32, %arg0 : i32, i32
  }
  func.func @transform_6(%arg0: i32, %arg1: i32) -> (i32, i32) {
    %c0_i32 = arith.constant 0 : i32
    return %arg1, %arg0 : i32, i32
  }
  func.func @transform_7(%arg0: i32, %arg1: i32) -> (i32, i32) {
    %c0_i32 = arith.constant 0 : i32
    return %arg1, %arg0 : i32, i32
  }
  func.func @transform_8(%arg0: i32, %arg1: i32) -> (i32, i32) {
    %c0_i32 = arith.constant 0 : i32
    return %arg1, %arg0 : i32, i32
  }
}

</mosaic_0001>

<llo_original>
// kernel: tpu_custom_call.1
$region0: #{tpu_custom_call.1}
  #allocation0 [shape = 'u32[]', space=smem, size = 0x4, offset = 0x4, fixed_abs, tag = 'smem constant byte address 0x4 - core index']
  #allocation1 [shape = 'u32[144,128]{1,0:T(1,128)}', space=vmem, size = 0x12000, scoped, tag = 'internal scratch']
  %s0 = inlined_call_operand.hbm [shape: f32[16,32], index: 0, kind: input, shape index: {}]
  %s1 = inlined_call_operand.hbm [shape: f32[16,32], index: 1, kind: input, shape index: {}]
  %s2 = inlined_call_operand.hbm [shape: f32[16,32], index: 2, kind: input, shape index: {}]
  %s3 = inlined_call_operand.hbm [shape: f32[32,32], index: 3, kind: input, shape index: {}]
  %s4 = inlined_call_operand.hbm [shape: f32[32,32], index: 4, kind: input, shape index: {}]
  %s5 = inlined_call_operand.hbm [shape: f32[32,32], index: 5, kind: input, shape index: {}]
  %s6 = inlined_call_operand.hbm [shape: f32[16,32], index: 6, kind: output, shape index: {0}]
  %s7 = inlined_call_operand.hbm [shape: f32[16,32], index: 7, kind: output, shape index: {1}]
  %s8 = inlined_call_operand.hbm [shape: f32[16,32], index: 8, kind: output, shape index: {2}]
  %9 = xla_tuple %s6, %s7, %s8
  %s10 = sld [smem:[#allocation0]]
  $region74: #{tpu_custom_call.1} parent=0
    _
  %s12 = ssub.s32 1, %s10
  %s13 = scalar_select 0, %s12, %s10
  $region1: #{tpu_custom_call.1} parent=0
    #allocation2 [shape = 'u8[8192]{0}', space=vmem, size = 0x2000, scoped, tag = 'input window, operand 0, single buffered']
    #allocation3 [shape = 's32[1]{0}', space=sflag, size = 0x4, scoped, tag = 'scoped memory for tpu_custom_call.1']
    #allocation4 [shape = 's32[1]{0}', space=sflag, size = 0x4, scoped, tag = 'scoped memory for tpu_custom_call.1']
    #allocation5 [shape = 'u8[8192]{0}', space=vmem, size = 0x2000, scoped, tag = 'input window, operand 1, single buffered']
    #allocation6 [shape = 's32[1]{0}', space=sflag, size = 0x4, scoped, tag = 'scoped memory for tpu_custom_call.1']
    #allocation7 [shape = 'u8[8192]{0}', space=vmem, size = 0x2000, scoped, tag = 'input window, operand 2, single buffered']
    #allocation8 [shape = 'u8[16384]{0}', space=vmem, size = 0x4000, scoped, tag = 'input window, operand 3, single buffered']
    #allocation9 [shape = 's32[1]{0}', space=sflag, size = 0x4, scoped, tag = 'scoped memory for tpu_custom_call.1']
    #allocation10 [shape = 'u8[16384]{0}', space=vmem, size = 0x4000, scoped, tag = 'input window, operand 4, single buffered']
    #allocation11 [shape = 'u8[16384]{0}', space=vmem, size = 0x4000, scoped, tag = 'input window, operand 5, single buffered']
    #allocation12 [shape = 's32[1]{0}', space=sflag, size = 0x4, scoped, tag = 'scoped memory for tpu_custom_call.1']
    #allocation13 [shape = 'u8[8192]{0}', space=vmem, size = 0x2000, scoped, tag = 'output window, operand 0, single buffered']
    #allocation14 [shape = 'u8[8192]{0}', space=vmem, size = 0x2000, scoped, tag = 'output window, operand 1, single buffered']
    #allocation15 [shape = 's32[1]{0}', space=sflag, size = 0x4, scoped, tag = 'scoped memory for tpu_custom_call.1']
    #allocation16 [shape = 'u8[8192]{0}', space=vmem, size = 0x2000, scoped, tag = 'output window, operand 2, single buffered']
    %14 = vsyncpa [#allocation3], 0
    %15 = vsyncpa [#allocation6], 0
    %16 = vsyncpa [#allocation9], 0
    %17 = vsyncpa [#allocation12], 0
    %18 = vsyncpa [#allocation4], 0
    %19 = vsyncpa [#allocation15], 0
    // Predicated region
    $region2: #{tpu_custom_call.1} parent=1 // pred_check
      _
    $region3: #{tpu_custom_call.1} parent=1 // pred_check_branch
      %21 = sbr.rel (0) target = $region5
    $region4: #{tpu_custom_call.1} parent=1 // pred_region
      %s23 = ssub.s32 256, 256
      %24 = vsyncadd [#allocation3], %s23
      %s25 = sshll.u32 [#allocation2], 4
      %s26 = int_to_ptr.vmem [resolvable:$true] %s25
      %31 = dma.hbm_to_vmem [thread:$0]  %s0, 256, %s26, [#allocation3], 128, 128, 8
    $region5: #{tpu_custom_call.1} parent=1 // pred_fallthru
      _
    // Predicated region
    $region6: #{tpu_custom_call.1} parent=1 // pred_check
      _
    $region7: #{tpu_custom_call.1} parent=1 // pred_check_branch
      %33 = sbr.rel (0) target = $region9
    $region8: #{tpu_custom_call.1} parent=1 // pred_region
      %s35 = ssub.s32 256, 256
      %36 = vsyncadd [#allocation6], %s35
      %s37 = sshll.u32 [#allocation5], 4
      %s38 = int_to_ptr.vmem [resolvable:$true] %s37
      %43 = dma.hbm_to_vmem [thread:$0]  %s1, 256, %s38, [#allocation6], 128, 128, 8
    $region9: #{tpu_custom_call.1} parent=1 // pred_fallthru
      _
    // Predicated region
    $region10: #{tpu_custom_call.1} parent=1 // pred_check
      _
    $region11: #{tpu_custom_call.1} parent=1 // pred_check_branch
      %45 = sbr.rel (0) target = $region13
    $region12: #{tpu_custom_call.1} parent=1 // pred_region
      %s47 = ssub.s32 256, 256
      %48 = vsyncadd [#allocation6], %s47
      %s49 = sshll.u32 [#allocation7], 4
      %s50 = int_to_ptr.vmem [resolvable:$true] %s49
      %55 = dma.hbm_to_vmem [thread:$0]  %s2, 256, %s50, [#allocation6], 128, 128, 8
    $region13: #{tpu_custom_call.1} parent=1 // pred_fallthru
      _
    // Predicated region
    $region14: #{tpu_custom_call.1} parent=1 // pred_check
      _
    $region15: #{tpu_custom_call.1} parent=1 // pred_check_branch
      %57 = sbr.rel (0) target = $region17
    $region16: #{tpu_custom_call.1} parent=1 // pred_region
      %s59 = ssub.s32 512, 512
      %60 = vsyncadd [#allocation9], %s59
      %s61 = sshll.u32 [#allocation8], 4
      %s62 = int_to_ptr.vmem [resolvable:$true] %s61
      %67 = dma.hbm_to_vmem [thread:$0]  %s3, 512, %s62, [#allocation9], 128, 128, 8
    $region17: #{tpu_custom_call.1} parent=1 // pred_fallthru
      _
    // Predicated region
    $region18: #{tpu_custom_call.1} parent=1 // pred_check
      _
    $region19: #{tpu_custom_call.1} parent=1 // pred_check_branch
      %69 = sbr.rel (0) target = $region21
    $region20: #{tpu_custom_call.1} parent=1 // pred_region
      %s71 = ssub.s32 512, 512
      %72 = vsyncadd [#allocation9], %s71
      %s73 = sshll.u32 [#allocation10], 4
      %s74 = int_to_ptr.vmem [resolvable:$true] %s73
      %79 = dma.hbm_to_vmem [thread:$0]  %s4, 512, %s74, [#allocation9], 128, 128, 8
    $region21: #{tpu_custom_call.1} parent=1 // pred_fallthru
      _
    // Predicated region
    $region22: #{tpu_custom_call.1} parent=1 // pred_check
      _
    $region23: #{tpu_custom_call.1} parent=1 // pred_check_branch
      %81 = sbr.rel (0) target = $region25
    $region24: #{tpu_custom_call.1} parent=1 // pred_region
      %s83 = ssub.s32 512, 512
      %84 = vsyncadd [#allocation12], %s83
      %s85 = sshll.u32 [#allocation11], 4
      %s86 = int_to_ptr.vmem [resolvable:$true] %s85
      %91 = dma.hbm_to_vmem [thread:$0]  %s5, 512, %s86, [#allocation12], 128, 128, 8
    $region25: #{tpu_custom_call.1} parent=1 // pred_fallthru
      _
    // Predicated region
    $region26: #{tpu_custom_call.1} parent=1 // pred_check
      _
    $region27: #{tpu_custom_call.1} parent=1 // pred_check_branch
      %93 = sbr.rel (0) target = $region29
    $region28: #{tpu_custom_call.1} parent=1 // pred_region
      %94 = dma.done [#allocation3], 256
    $region29: #{tpu_custom_call.1} parent=1 // pred_fallthru
      _
    // Predicated region
    $region30: #{tpu_custom_call.1} parent=1 // pred_check
      _
    $region31: #{tpu_custom_call.1} parent=1 // pred_check_branch
      %96 = sbr.rel (0) target = $region33
    $region32: #{tpu_custom_call.1} parent=1 // pred_region
      %97 = dma.done [#allocation6], 256
    $region33: #{tpu_custom_call.1} parent=1 // pred_fallthru
      _
    // Predicated region
    $region34: #{tpu_custom_call.1} parent=1 // pred_check
      _
    $region35: #{tpu_custom_call.1} parent=1 // pred_check_branch
      %99 = sbr.rel (0) target = $region37
    $region36: #{tpu_custom_call.1} parent=1 // pred_region
      %100 = dma.done [#allocation6], 256
    $region37: #{tpu_custom_call.1} parent=1 // pred_fallthru
      _
    // Predicated region
    $region38: #{tpu_custom_call.1} parent=1 // pred_check
      _
    $region39: #{tpu_custom_call.1} parent=1 // pred_check_branch
      %102 = sbr.rel (0) target = $region41
    $region40: #{tpu_custom_call.1} parent=1 // pred_region
      %103 = dma.done [#allocation9], 512
    $region41: #{tpu_custom_call.1} parent=1 // pred_fallthru
      _
    // Predicated region
    $region42: #{tpu_custom_call.1} parent=1 // pred_check
      _
    $region43: #{tpu_custom_call.1} parent=1 // pred_check_branch
      %105 = sbr.rel (0) target = $region45
    $region44: #{tpu_custom_call.1} parent=1 // pred_region
      %106 = dma.done [#allocation9], 512
    $region45: #{tpu_custom_call.1} parent=1 // pred_fallthru
      _
    // Predicated region
    $region46: #{tpu_custom_call.1} parent=1 // pred_check
      _
    $region47: #{tpu_custom_call.1} parent=1 // pred_check_branch
      %108 = sbr.rel (0) target = $region49
    $region48: #{tpu_custom_call.1} parent=1 // pred_region
      %109 = dma.done [#allocation12], 512
    $region49: #{tpu_custom_call.1} parent=1 // pred_fallthru
      _
    %v110 = vld [vmem:[#allocation2] sm:$0xff]
    %v111 = vld [vmem:[#allocation2 + $0x8] sm:$0xff]
    %v112 = vld [vmem:[#allocation8] sm:$0xff]
    %v113 = vld [vmem:[#allocation8 + $0x8] sm:$0xff]
    %v114 = vld [vmem:[#allocation8 + $0x10] sm:$0xff]
    %v115 = vld [vmem:[#allocation8 + $0x18] sm:$0xff]
    %vm116 = vcmask 261120
    %v118 = vsel %vm116, %v110, 0
    %v121 = vsel %vm116, %v111, 0
    %123 = vmatprep.subr.mxu0 0.0
    %124 = vmatpush1.msra.mxu0 0.0
    %125 = vmatprep.subr.mxu0 0.0
    %126 = vmatpush1.msra.mxu0 0.0
    %127 = vmatprep.subr.mxu0 0.0
    %128 = vmatpush1.msra.mxu0 0.0
    %129 = vmatprep.subr.mxu0 0.0
    %130 = vmatpush1.msra.mxu0 0.0
    %131 = vmatprep.subr.mxu0 0.0
    %132 = vmatpush1.msra.mxu0 0.0
    %133 = vmatprep.subr.mxu0 0.0
    %134 = vmatpush1.msra.mxu0 0.0
    %135 = vmatprep.subr.mxu0 0.0
    %136 = vmatpush1.msra.mxu0 0.0
    %137 = vmatprep.subr.mxu0 0.0
    %138 = vmatpush1.msra.mxu0 0.0
    %139 = vmatprep.subr.mxu0 0.0
    %140 = vmatpush1.msra.mxu0 0.0
    %141 = vmatprep.subr.mxu0 0.0
    %142 = vmatpush1.msra.mxu0 0.0
    %143 = vmatprep.subr.mxu0 0.0
    %144 = vmatpush1.msra.mxu0 0.0
    %145 = vmatprep.subr.mxu0 0.0
    %146 = vmatpush1.msra.mxu0 0.0
    %147 = vmatprep.subr.mxu0 0.0
    %148 = vmatpush1.msra.mxu0 %v115
    %149 = vmatprep.subr.mxu0 0.0
    %150 = vmatpush1.msra.mxu0 %v114
    %151 = vmatprep.subr.mxu0 0.0
    %152 = vmatpush1.msra.mxu0 %v113
    %153 = vmatprep.subr.mxu0 0.0
    %154 = vmatpush1.msra.mxu0 %v112
    %155 = vmatprep.subr.mxu0 0.0
    %156 = vmatpush2.msra.mxu0 0.0
    %157 = vmatprep.subr.mxu0 0.0
    %158 = vmatpush2.msra.mxu0 0.0
    %159 = vmatprep.subr.mxu0 0.0
    %160 = vmatpush2.msra.mxu0 0.0
    %161 = vmatprep.subr.mxu0 0.0
    %162 = vmatpush2.msra.mxu0 0.0
    %163 = vmatprep.subr.mxu0 0.0
    %164 = vmatpush2.msra.mxu0 0.0
    %165 = vmatprep.subr.mxu0 0.0
    %166 = vmatpush2.msra.mxu0 0.0
    %167 = vmatprep.subr.mxu0 0.0
    %168 = vmatpush2.msra.mxu0 0.0
    %169 = vmatprep.subr.mxu0 0.0
    %170 = vmatpush2.msra.mxu0 0.0
    %171 = vmatprep.subr.mxu0 0.0
    %172 = vmatpush2.msra.mxu0 0.0
    %173 = vmatprep.subr.mxu0 0.0
    %174 = vmatpush2.msra.mxu0 0.0
    %175 = vmatprep.subr.mxu0 0.0
    %176 = vmatpush2.msra.mxu0 0.0
    %177 = vmatprep.subr.mxu0 0.0
    %178 = vmatpush2.msra.mxu0 0.0
    %179 = vmatprep.subr.mxu0 0.0
    %180 = vmatpush2.msra.mxu0 0.0
    %181 = vmatprep.subr.mxu0 0.0
    %182 = vmatpush2.msra.mxu0 0.0
    %183 = vmatprep.subr.mxu0 0.0
    %184 = vmatpush2.msra.mxu0 0.0
    %185 = vmatprep.subr.mxu0 0.0
    %186 = vmatpush2.msra.mxu0 0.0
    %187 = vmatprep.mubr.f32.mxu0 0.0
    %188 = vmatmul.mubr.f32.gmra.mxu0 %v118
    %v189 = vpop.f32.mrf.mxu0
    %v190 = vadd.f32 0.0, %v189
    %v191 = vpop.f32.mrf.mxu0
    %192 = vmatprep.mubr.f32.mxu0 0.0
    %193 = vmatmul.mubr.f32.gmra.mxu0 %v121
    %v194 = vpop.f32.mrf.mxu0
    %v195 = vadd.f32 0.0, %v194
    %v196 = vpop.f32.mrf.mxu0
    %197 = vdwg.mxu0
    %198 = vst.msk [vmem:[#allocation13] sm:$0xff] %vm116, %v190
    %199 = vst.msk [vmem:[#allocation13 + $0x8] sm:$0xff] %vm116, %v195
    %v200 = vld [vmem:[#allocation5] sm:$0xff]
    %v201 = vld [vmem:[#allocation5 + $0x8] sm:$0xff]
    %v202 = vld [vmem:[#allocation10] sm:$0xff]
    %v203 = vld [vmem:[#allocation10 + $0x8] sm:$0xff]
    %v204 = vld [vmem:[#allocation10 + $0x10] sm:$0xff]
    %v205 = vld [vmem:[#allocation10 + $0x18] sm:$0xff]
    %v207 = vsel %vm116, %v200, 0
    %v210 = vsel %vm116, %v201, 0
    %212 = vmatprep.subr.mxu0 0.0
    %213 = vmatpush1.msra.mxu0 0.0
    %214 = vmatprep.subr.mxu0 0.0
    %215 = vmatpush1.msra.mxu0 0.0
    %216 = vmatprep.subr.mxu0 0.0
    %217 = vmatpush1.msra.mxu0 0.0
    %218 = vmatprep.subr.mxu0 0.0
    %219 = vmatpush1.msra.mxu0 0.0
    %220 = vmatprep.subr.mxu0 0.0
    %221 = vmatpush1.msra.mxu0 0.0
    %222 = vmatprep.subr.mxu0 0.0
    %223 = vmatpush1.msra.mxu0 0.0
    %224 = vmatprep.subr.mxu0 0.0
    %225 = vmatpush1.msra.mxu0 0.0
    %226 = vmatprep.subr.mxu0 0.0
    %227 = vmatpush1.msra.mxu0 0.0
    %228 = vmatprep.subr.mxu0 0.0
    %229 = vmatpush1.msra.mxu0 0.0
    %230 = vmatprep.subr.mxu0 0.0
    %231 = vmatpush1.msra.mxu0 0.0
    %232 = vmatprep.subr.mxu0 0.0
    %233 = vmatpush1.msra.mxu0 0.0
    %234 = vmatprep.subr.mxu0 0.0
    %235 = vmatpush1.msra.mxu0 0.0
    %236 = vmatprep.subr.mxu0 0.0
    %237 = vmatpush1.msra.mxu0 %v205
    %238 = vmatprep.subr.mxu0 0.0
    %239 = vmatpush1.msra.mxu0 %v204
    %240 = vmatprep.subr.mxu0 0.0
    %241 = vmatpush1.msra.mxu0 %v203
    %242 = vmatprep.subr.mxu0 0.0
    %243 = vmatpush1.msra.mxu0 %v202
    %244 = vmatprep.subr.mxu0 0.0
    %245 = vmatpush2.msra.mxu0 0.0
    %246 = vmatprep.subr.mxu0 0.0
    %247 = vmatpush2.msra.mxu0 0.0
    %248 = vmatprep.subr.mxu0 0.0
    %249 = vmatpush2.msra.mxu0 0.0
    %250 = vmatprep.subr.mxu0 0.0
    %251 = vmatpush2.msra.mxu0 0.0
    %252 = vmatprep.subr.mxu0 0.0
    %253 = vmatpush2.msra.mxu0 0.0
    %254 = vmatprep.subr.mxu0 0.0
    %255 = vmatpush2.msra.mxu0 0.0
    %256 = vmatprep.subr.mxu0 0.0
    %257 = vmatpush2.msra.mxu0 0.0
    %258 = vmatprep.subr.mxu0 0.0
    %259 = vmatpush2.msra.mxu0 0.0
    %260 = vmatprep.subr.mxu0 0.0
    %261 = vmatpush2.msra.mxu0 0.0
    %262 = vmatprep.subr.mxu0 0.0
    %263 = vmatpush2.msra.mxu0 0.0
    %264 = vmatprep.subr.mxu0 0.0
    %265 = vmatpush2.msra.mxu0 0.0
    %266 = vmatprep.subr.mxu0 0.0
    %267 = vmatpush2.msra.mxu0 0.0
    %268 = vmatprep.subr.mxu0 0.0
    %269 = vmatpush2.msra.mxu0 0.0
    %270 = vmatprep.subr.mxu0 0.0
    %271 = vmatpush2.msra.mxu0 0.0
    %272 = vmatprep.subr.mxu0 0.0
    %273 = vmatpush2.msra.mxu0 0.0
    %274 = vmatprep.subr.mxu0 0.0
    %275 = vmatpush2.msra.mxu0 0.0
    %276 = vmatprep.mubr.f32.mxu0 0.0
    %277 = vmatmul.mubr.f32.gmra.mxu0 %v207
    %v278 = vpop.f32.mrf.mxu0
    %v279 = vadd.f32 0.0, %v278
    %v280 = vpop.f32.mrf.mxu0
    %281 = vmatprep.mubr.f32.mxu0 0.0
    %282 = vmatmul.mubr.f32.gmra.mxu0 %v210
    %v283 = vpop.f32.mrf.mxu0
    %v284 = vadd.f32 0.0, %v283
    %v285 = vpop.f32.mrf.mxu0
    %286 = vdwg.mxu0
    %287 = vst.msk [vmem:[#allocation14] sm:$0xff] %vm116, %v279
    %288 = vst.msk [vmem:[#allocation14 + $0x8] sm:$0xff] %vm116, %v284
    %v289 = vld [vmem:[#allocation7] sm:$0xff]
    %v290 = vld [vmem:[#allocation7 + $0x8] sm:$0xff]
    %v291 = vld [vmem:[#allocation11] sm:$0xff]
    %v292 = vld [vmem:[#allocation11 + $0x8] sm:$0xff]
    %v293 = vld [vmem:[#allocation11 + $0x10] sm:$0xff]
    %v294 = vld [vmem:[#allocation11 + $0x18] sm:$0xff]
    %v296 = vsel %vm116, %v289, 0
    %v299 = vsel %vm116, %v290, 0
    %301 = vmatprep.subr.mxu0 0.0
    %302 = vmatpush1.msra.mxu0 0.0
    %303 = vmatprep.subr.mxu0 0.0
    %304 = vmatpush1.msra.mxu0 0.0
    %305 = vmatprep.subr.mxu0 0.0
    %306 = vmatpush1.msra.mxu0 0.0
    %307 = vmatprep.subr.mxu0 0.0
    %308 = vmatpush1.msra.mxu0 0.0
    %309 = vmatprep.subr.mxu0 0.0
    %310 = vmatpush1.msra.mxu0 0.0
    %311 = vmatprep.subr.mxu0 0.0
    %312 = vmatpush1.msra.mxu0 0.0
    %313 = vmatprep.subr.mxu0 0.0
    %314 = vmatpush1.msra.mxu0 0.0
    %315 = vmatprep.subr.mxu0 0.0
    %316 = vmatpush1.msra.mxu0 0.0
    %317 = vmatprep.subr.mxu0 0.0
    %318 = vmatpush1.msra.mxu0 0.0
    %319 = vmatprep.subr.mxu0 0.0
    %320 = vmatpush1.msra.mxu0 0.0
    %321 = vmatprep.subr.mxu0 0.0
    %322 = vmatpush1.msra.mxu0 0.0
    %323 = vmatprep.subr.mxu0 0.0
    %324 = vmatpush1.msra.mxu0 0.0
    %325 = vmatprep.subr.mxu0 0.0
    %326 = vmatpush1.msra.mxu0 %v294
    %327 = vmatprep.subr.mxu0 0.0
    %328 = vmatpush1.msra.mxu0 %v293
    %329 = vmatprep.subr.mxu0 0.0
    %330 = vmatpush1.msra.mxu0 %v292
    %331 = vmatprep.subr.mxu0 0.0
    %332 = vmatpush1.msra.mxu0 %v291
    %333 = vmatprep.subr.mxu0 0.0
    %334 = vmatpush2.msra.mxu0 0.0
    %335 = vmatprep.subr.mxu0 0.0
    %336 = vmatpush2.msra.mxu0 0.0
    %337 = vmatprep.subr.mxu0 0.0
    %338 = vmatpush2.msra.mxu0 0.0
    %339 = vmatprep.subr.mxu0 0.0
    %340 = vmatpush2.msra.mxu0 0.0
    %341 = vmatprep.subr.mxu0 0.0
    %342 = vmatpush2.msra.mxu0 0.0
    %343 = vmatprep.subr.mxu0 0.0
    %344 = vmatpush2.msra.mxu0 0.0
    %345 = vmatprep.subr.mxu0 0.0
    %346 = vmatpush2.msra.mxu0 0.0
    %347 = vmatprep.subr.mxu0 0.0
    %348 = vmatpush2.msra.mxu0 0.0
    %349 = vmatprep.subr.mxu0 0.0
    %350 = vmatpush2.msra.mxu0 0.0
    %351 = vmatprep.subr.mxu0 0.0
    %352 = vmatpush2.msra.mxu0 0.0
    %353 = vmatprep.subr.mxu0 0.0
    %354 = vmatpush2.msra.mxu0 0.0
    %355 = vmatprep.subr.mxu0 0.0
    %356 = vmatpush2.msra.mxu0 0.0
    %357 = vmatprep.subr.mxu0 0.0
    %358 = vmatpush2.msra.mxu0 0.0
    %359 = vmatprep.subr.mxu0 0.0
    %360 = vmatpush2.msra.mxu0 0.0
    %361 = vmatprep.subr.mxu0 0.0
    %362 = vmatpush2.msra.mxu0 0.0
    %363 = vmatprep.subr.mxu0 0.0
    %364 = vmatpush2.msra.mxu0 0.0
    %365 = vmatprep.mubr.f32.mxu0 0.0
    %366 = vmatmul.mubr.f32.gmra.mxu0 %v296
    %v367 = vpop.f32.mrf.mxu0
    %v368 = vadd.f32 0.0, %v367
    %v369 = vpop.f32.mrf.mxu0
    %370 = vmatprep.mubr.f32.mxu0 0.0
    %371 = vmatmul.mubr.f32.gmra.mxu0 %v299
    %v372 = vpop.f32.mrf.mxu0
    %v373 = vadd.f32 0.0, %v372
    %v374 = vpop.f32.mrf.mxu0
    %375 = vdwg.mxu0
    %376 = vst.msk [vmem:[#allocation16] sm:$0xff] %vm116, %v368
    %377 = vst.msk [vmem:[#allocation16 + $0x8] sm:$0xff] %vm116, %v373
    // Predicated region
    $region50: #{tpu_custom_call.1} parent=1 // pred_check
      _
    $region51: #{tpu_custom_call.1} parent=1 // pred_check_branch
      %379 = sbr.rel (0) target = $region53
    $region52: #{tpu_custom_call.1} parent=1 // pred_region
      %s381 = ssub.s32 256, 256
      %382 = vsyncadd [#allocation4], %s381
      %s383 = sshll.u32 [#allocation13], 4
      %s384 = int_to_ptr.vmem [resolvable:$true] %s383
      %389 = dma.vmem_to_hbm [thread:$0]  %s384, 256, %s6, [#allocation4], 128, 128, 8
    $region53: #{tpu_custom_call.1} parent=1 // pred_fallthru
      _
    // Predicated region
    $region54: #{tpu_custom_call.1} parent=1 // pred_check
      _
    $region55: #{tpu_custom_call.1} parent=1 // pred_check_branch
      %391 = sbr.rel (0) target = $region57
    $region56: #{tpu_custom_call.1} parent=1 // pred_region
      %s393 = ssub.s32 256, 256
      %394 = vsyncadd [#allocation15], %s393
      %s395 = sshll.u32 [#allocation14], 4
      %s396 = int_to_ptr.vmem [resolvable:$true] %s395
      %401 = dma.vmem_to_hbm [thread:$0]  %s396, 256, %s7, [#allocation15], 128, 128, 8
    $region57: #{tpu_custom_call.1} parent=1 // pred_fallthru
      _
    // Predicated region
    $region58: #{tpu_custom_call.1} parent=1 // pred_check
      _
    $region59: #{tpu_custom_call.1} parent=1 // pred_check_branch
      %403 = sbr.rel (0) target = $region61
    $region60: #{tpu_custom_call.1} parent=1 // pred_region
      %s405 = ssub.s32 256, 256
      %406 = vsyncadd [#allocation15], %s405
      %s407 = sshll.u32 [#allocation16], 4
      %s408 = int_to_ptr.vmem [resolvable:$true] %s407
      %413 = dma.vmem_to_hbm [thread:$0]  %s408, 256, %s8, [#allocation15], 128, 128, 8
    $region61: #{tpu_custom_call.1} parent=1 // pred_fallthru
      _
    // Predicated region
    $region62: #{tpu_custom_call.1} parent=1 // pred_check
      _
    $region63: #{tpu_custom_call.1} parent=1 // pred_check_branch
      %415 = sbr.rel (0) target = $region65
    $region64: #{tpu_custom_call.1} parent=1 // pred_region
      %416 = dma.done [#allocation4], 256
    $region65: #{tpu_custom_call.1} parent=1 // pred_fallthru
      _
    // Predicated region
    $region66: #{tpu_custom_call.1} parent=1 // pred_check
      _
    $region67: #{tpu_custom_call.1} parent=1 // pred_check_branch
      %418 = sbr.rel (0) target = $region69
    $region68: #{tpu_custom_call.1} parent=1 // pred_region
      %419 = dma.done [#allocation15], 256
    $region69: #{tpu_custom_call.1} parent=1 // pred_fallthru
      _
    // Predicated region
    $region70: #{tpu_custom_call.1} parent=1 // pred_check
      _
    $region71: #{tpu_custom_call.1} parent=1 // pred_check_branch
      %421 = sbr.rel (0) target = $region73
    $region72: #{tpu_custom_call.1} parent=1 // pred_region
      %422 = dma.done [#allocation15], 256
    $region73: #{tpu_custom_call.1} parent=1 // pred_fallthru
      _
    %423 = vsyncpa [#allocation3], 1
    %424 = vsyncpa [#allocation6], 1
    %425 = vsyncpa [#allocation9], 1
    %426 = vsyncpa [#allocation12], 1
    %427 = vsyncpa [#allocation4], 1
    %428 = vsyncpa [#allocation15], 1

</llo_original>
